<compile_context>
chip_gen: v7x
topology: tpu7x:2x2x1
jax: 0.10.0
libtpu: 0.0.40
codegen_flags: <defaults>
</compile_context>

<pallas_src>
import functools

import jax
import jax.numpy as jnp
from jax.experimental import pallas as pl
from jax.experimental.pallas import tpu as pltpu


def _label_smoothing_kernel(pred_ref, target_ref, per_row_ref, dist_ref, *,
                            classes_target, confidence, smooth_val, fast_exp):
    """One batch tile: per-row loss partials + true_dist tile.

    Loss is computed algebraically without materializing log_softmax:
        sum_c(-td * (x - m - lse)) = (m + lse) * rowsum(td) - sum_c(td * x)
    """
    pred = pred_ref[...].astype(jnp.float32)                       # (TB, C)
    tb, c = pred.shape

    # --- log-sum-exp pieces (numerically stable); no full logp temp ---
    m = jnp.max(pred, axis=-1, keepdims=True)                      # (TB, 1)
    shifted = pred - m
    if fast_exp:
        # bf16 EUP path (v6e/v7x only); gated, default off (accuracy).
        e = jnp.exp(shifted.astype(jnp.bfloat16)).astype(jnp.float32)
    else:
        e = jnp.exp(shifted)
    lse = jnp.log(jnp.sum(e, axis=-1, keepdims=True))              # (TB, 1)

    # --- true_dist: [zeros(classes_target) | smooth_val], scatter confidence ---
    col = jax.lax.broadcasted_iota(jnp.int32, (tb, c), 1)
    tgt = target_ref[...]                                          # (TB, 1) int32
    base = jnp.where(col >= classes_target,
                     jnp.float32(smooth_val), jnp.float32(0.0))
    true_dist = jnp.where(col == tgt, jnp.float32(confidence), base)

    # --- per-row loss, algebraic form (mean over batch done in wrapper) ---
    n_smooth = c - classes_target
    rowsum_td = (jnp.float32(confidence) + jnp.float32(smooth_val * n_smooth)
                 - jnp.where(tgt >= classes_target,
                             jnp.float32(smooth_val), jnp.float32(0.0)))
    td_dot_pred = jnp.sum(true_dist * pred, axis=-1, keepdims=True)
    per_row_ref[...] = (m + lse) * rowsum_td - td_dot_pred
    dist_ref[...] = true_dist.astype(dist_ref.dtype)


def _vmem_caps():
    """Return (scoped_vmem_limit_bytes, tile_budget_bytes).

    Generation-aware when TpuInfo is queryable (128 MiB VMEM on v5e/v6e,
    64 MiB per core on v7x); falls back to a v7x-safe 64 MiB assumption.
    """
    try:
        cap = int(pltpu.get_tpu_info().vmem_capacity_bytes)
        if cap <= 0:
            raise ValueError
    except Exception:
        cap = 64 * 1024 * 1024          # v7x per-core physical -- safe everywhere
    limit = (cap * 3) // 4              # ~96 MiB on v5e/v6e, ~48 MiB on v7x
    budget = (limit * 2) // 3           # headroom for compiler-internal scratch
    return int(limit), int(budget)


def _pick_block_rows(batch, c, in_dtype, out_dtype, budget_bytes):
    """Largest batch tile (multiple of 8, byte-capped) whose double-buffered,
    lane-padded pipeline buffers PLUS live in-body f32 temporaries fit."""
    c_pad = ((c + 127) // 128) * 128                # lane padding in VMEM
    in_b = jnp.dtype(in_dtype).itemsize
    out_b = jnp.dtype(out_dtype).itemsize
    per_row_bytes = (2 * c_pad * in_b               # pred, x2 pipeline buffers
                     + 2 * c_pad * out_b            # true_dist writeback, x2 buffers
                     + 4 * c_pad * 4                # live f32 body temps (pred_f32,
                                                    #   exp, true_dist, iota/product)
                     + 4 * 128 * 4)                 # target + per_row, lane-padded x2
    tb = budget_bytes // per_row_bytes
    tb = max(8, min(int(tb), 4096, batch))          # byte-cap dominates; 4096-row cap
    if tb < batch:                                  # partial tiles allowed, but keep
        tb = max(8, (tb // 8) * 8)                  # (8,128) block legality
    return int(tb)


def label_smoothing_loss(pred, target, *, classes_target, classes, smoothing=0.0,
                         true_dist_dtype=jnp.float32, fast_exp=False):
    """Returns (loss_scalar, true_dist) matching the PyTorch forward."""
    B, C = pred.shape
    assert C == classes_target + (classes - 10), "pred width must match cat'd true_dist"
    target2d = target.astype(jnp.int32).reshape(B, 1)

    vmem_limit, budget = _vmem_caps()
    tb = _pick_block_rows(B, C, pred.dtype, true_dist_dtype, budget)
    grid = (pl.cdiv(B, tb),)

    kernel = functools.partial(
        _label_smoothing_kernel,
        classes_target=classes_target,
        confidence=1.0 - smoothing,
        smooth_val=smoothing / (classes - 10),
        fast_exp=fast_exp,
    )

    per_row, true_dist = pl.pallas_call(
        kernel,
        out_shape=(
            jax.ShapeDtypeStruct((B, 1), jnp.float32),        # per-row loss partials
            jax.ShapeDtypeStruct((B, C), true_dist_dtype),    # true_dist
        ),
        grid_spec=pltpu.PrefetchScalarGridSpec(
            num_scalar_prefetch=0,
            grid=grid,
            in_specs=[
                pl.BlockSpec((tb, C), lambda i: (i, 0)),      # pred, native dtype
                pl.BlockSpec((tb, 1), lambda i: (i, 0)),      # target (B,1) int32
            ],
            out_specs=(
                pl.BlockSpec((tb, 1), lambda i: (i, 0)),
                pl.BlockSpec((tb, C), lambda i: (i, 0)),
            ),
        ),
        compiler_params=pltpu.CompilerParams(
            # TODO(synk): on v7x, verify both TensorCores engage on the batch axis;
            # if not, switch to pltpu.CORE_PARALLEL / pl.core_map.
            dimension_semantics=("parallel",),
            vmem_limit_bytes=vmem_limit,
        ),
    )(pred, target2d)

    # Tiny final reduction in XLA; multiply by precomputed 1/B (no divide).
    loss = jnp.sum(per_row) * jnp.float32(1.0 / B)
    return loss, true_dist


if __name__ == "__main__":
    # Small deterministic config consistent with the module:
    #   classes_target = 22, classes = 20  ->  C = 22 + (20 - 10) = 32
    B = 8
    CLASSES_TARGET = 22
    CLASSES = 20
    C = CLASSES_TARGET + (CLASSES - 10)
    SMOOTHING = 0.1

    key = jax.random.PRNGKey(0)
    kp, kt = jax.random.split(key)
    pred = jax.random.normal(kp, (B, C), dtype=jnp.float32)
    target = jax.random.randint(kt, (B,), 0, C, dtype=jnp.int32)

    loss, true_dist = label_smoothing_loss(
        pred, target,
        classes_target=CLASSES_TARGET, classes=CLASSES, smoothing=SMOOTHING,
    )
    jax.block_until_ready((loss, true_dist))

    # Silent sanity check against a pure-JAX reference.
    logp_ref = jax.nn.log_softmax(pred, axis=-1)
    col = jnp.arange(C)[None, :]
    base = jnp.where(col >= CLASSES_TARGET, SMOOTHING / (CLASSES - 10), 0.0)
    td_ref = jnp.where(col == target[:, None], 1.0 - SMOOTHING, base)
    loss_ref = jnp.mean(jnp.sum(-td_ref * logp_ref, axis=-1))
    assert jnp.allclose(loss, loss_ref, atol=1e-5), (loss, loss_ref)
    assert jnp.allclose(true_dist, td_ref, atol=1e-6)

    print("KERNEL_OK")
</pallas_src>

<mosaic_0001>
module attributes {stable_mosaic.version = 11 : i64} {
  func.func @_label_smoothing_kernel(%arg0: i32, %arg1: memref<8x32xf32, #tpu.memory_space<vmem>>, %arg2: memref<8x1xi32, #tpu.memory_space<vmem>>, %arg3: memref<8x1xf32, #tpu.memory_space<vmem>>, %arg4: memref<8x32xf32, #tpu.memory_space<vmem>>) attributes {dimension_semantics = [#tpu.dimension_semantics<parallel>], iteration_bounds = array<i64: 1>, scalar_prefetch = 0 : i64, scratch_operands = 0 : i64, tpu.core_type = #tpu.core_type<tc>, window_params = [{transform_indices = @transform_0, window_bounds = array<i64: 8, 32>}, {transform_indices = @transform_1, window_bounds = array<i64: 8, 1>}, {transform_indices = @transform_2, window_bounds = array<i64: 8, 1>}, {transform_indices = @transform_3, window_bounds = array<i64: 8, 32>}]} {
    %c0 = arith.constant 0 : index
    %c0_0 = arith.constant 0 : index
    %0 = vector.load %arg1[%c0, %c0_0] : memref<8x32xf32, #tpu.memory_space<vmem>>, vector<8x32xf32>
    %cst = arith.constant dense<0xFF800000> : vector<8xf32>
    %1 = vector.multi_reduction <maximumf>, %0, %cst [1] : vector<8x32xf32> to vector<8xf32>
    %2 = vector.shape_cast %1 : vector<8xf32> to vector<8x1xf32>
    %3 = vector.broadcast %2 : vector<8x1xf32> to vector<8x32xf32>
    %4 = arith.subf %0, %3 : vector<8x32xf32>
    %5 = math.exp %4 : vector<8x32xf32>
    %cst_1 = arith.constant dense<0.000000e+00> : vector<8xf32>
    %6 = vector.multi_reduction <add>, %5, %cst_1 [1] : vector<8x32xf32> to vector<8xf32>
    %7 = vector.shape_cast %6 : vector<8xf32> to vector<8x1xf32>
    %8 = math.log %7 : vector<8x1xf32>
    %9 = tpu.iota {dimensions = array<i32: 1>} : vector<8x32xi32>
    %c0_2 = arith.constant 0 : index
    %c0_3 = arith.constant 0 : index
    %10 = vector.load %arg2[%c0_2, %c0_3] : memref<8x1xi32, #tpu.memory_space<vmem>>, vector<8x1xi32>
    %c22_i32 = arith.constant 22 : i32
    %11 = vector.broadcast %c22_i32 : i32 to vector<8x32xi32>
    %12 = arith.cmpi sge, %9, %11 : vector<8x32xi32>
    %cst_4 = arith.constant 0.00999999977 : f32
    %cst_5 = arith.constant 0.000000e+00 : f32
    %13 = vector.broadcast %cst_4 : f32 to vector<8x32xf32>
    %14 = vector.broadcast %cst_5 : f32 to vector<8x32xf32>
    %15 = arith.select %12, %13, %14 : vector<8x32xi1>, vector<8x32xf32>
    %16 = vector.broadcast %10 : vector<8x1xi32> to vector<8x32xi32>
    %17 = arith.cmpi eq, %9, %16 : vector<8x32xi32>
    %cst_6 = arith.constant 0.899999976 : f32
    %18 = vector.broadcast %cst_6 : f32 to vector<8x32xf32>
    %19 = arith.select %17, %18, %15 : vector<8x32xi1>, vector<8x32xf32>
    %cst_7 = arith.constant 0.899999976 : f32
    %cst_8 = arith.constant 1.000000e-01 : f32
    %20 = arith.addf %cst_7, %cst_8 : f32
    %c22_i32_9 = arith.constant 22 : i32
    %21 = vector.broadcast %c22_i32_9 : i32 to vector<8x1xi32>
    %22 = arith.cmpi sge, %10, %21 : vector<8x1xi32>
    %cst_10 = arith.constant 0.00999999977 : f32
    %cst_11 = arith.constant 0.000000e+00 : f32
    %23 = vector.broadcast %cst_10 : f32 to vector<8x1xf32>
    %24 = vector.broadcast %cst_11 : f32 to vector<8x1xf32>
    %25 = arith.select %22, %23, %24 : vector<8x1xi1>, vector<8x1xf32>
    %26 = vector.broadcast %20 : f32 to vector<8x1xf32>
    %27 = arith.subf %26, %25 : vector<8x1xf32>
    %28 = arith.mulf %19, %0 : vector<8x32xf32>
    %cst_12 = arith.constant dense<0.000000e+00> : vector<8xf32>
    %29 = vector.multi_reduction <add>, %28, %cst_12 [1] : vector<8x32xf32> to vector<8xf32>
    %30 = vector.shape_cast %29 : vector<8xf32> to vector<8x1xf32>
    %31 = arith.addf %2, %8 : vector<8x1xf32>
    %32 = arith.mulf %31, %27 : vector<8x1xf32>
    %33 = arith.subf %32, %30 : vector<8x1xf32>
    %c0_13 = arith.constant 0 : index
    %c0_14 = arith.constant 0 : index
    %34 = vector.load %arg3[%c0_13, %c0_14] : memref<8x1xf32, #tpu.memory_space<vmem>>, vector<8x1xf32>
    tpu.vector_store %arg3[%c0_13, %c0_14], %33 {strides = array<i32>} : memref<8x1xf32, #tpu.memory_space<vmem>>, vector<8x1xf32>,
    %c0_15 = arith.constant 0 : index
    %c0_16 = arith.constant 0 : index
    %35 = vector.load %arg4[%c0_15, %c0_16] : memref<8x32xf32, #tpu.memory_space<vmem>>, vector<8x32xf32>
    tpu.vector_store %arg4[%c0_15, %c0_16], %19 {strides = array<i32>} : memref<8x32xf32, #tpu.memory_space<vmem>>, vector<8x32xf32>,
    return
  }
  func.func @transform_0(%arg0: i32) -> (i32, i32) {
    %c0_i32 = arith.constant 0 : i32
    %c0_i32_0 = arith.constant 0 : i32
    return %arg0, %c0_i32 : i32, i32
  }
  func.func @transform_1(%arg0: i32) -> (i32, i32) {
    %c0_i32 = arith.constant 0 : i32
    %c0_i32_0 = arith.constant 0 : i32
    return %arg0, %c0_i32 : i32, i32
  }
  func.func @transform_2(%arg0: i32) -> (i32, i32) {
    %c0_i32 = arith.constant 0 : i32
    %c0_i32_0 = arith.constant 0 : i32
    return %arg0, %c0_i32 : i32, i32
  }
  func.func @transform_3(%arg0: i32) -> (i32, i32) {
    %c0_i32 = arith.constant 0 : i32
    %c0_i32_0 = arith.constant 0 : i32
    return %arg0, %c0_i32 : i32, i32
  }
}

</mosaic_0001>

<llo_original>
// kernel: tpu_custom_call.1
$region0: #{tpu_custom_call.1}
  #allocation0 [shape = 'u32[]', space=smem, size = 0x4, offset = 0x4, fixed_abs, tag = 'smem constant byte address 0x4 - core index']
  #allocation1 [shape = 'u32[144,128]{1,0:T(1,128)}', space=vmem, size = 0x12000, scoped, tag = 'internal scratch']
  %s0 = inlined_call_operand.vmem [shape: f32[8,32], index: 0, kind: input, shape index: {}]
  %s1 = inlined_call_operand.vmem [shape: s32[8,1], index: 1, kind: input, shape index: {}]
  %s2 = inlined_call_operand.vmem [shape: f32[8,1], index: 2, kind: output, shape index: {0}]
  %s3 = inlined_call_operand.hbm [shape: f32[8,32], index: 3, kind: output, shape index: {1}]
  %4 = xla_tuple %s2, %s3
  %s5 = sld [smem:[#allocation0]]
  $region26: #{tpu_custom_call.1} parent=0
    _
  %s7 = ssub.s32 1, %s5
  %s8 = scalar_select 0, %s7, %s5
  $region1: #{tpu_custom_call.1} parent=0
    #allocation2 [shape = 'u8[4096]{0}', space=vmem, size = 0x1000, scoped, tag = 'output window, operand 1, single buffered']
    #allocation3 [shape = 's32[1]{0}', space=sflag, size = 0x4, scoped, tag = 'scoped memory for tpu_custom_call.1']
    %9 = vsyncpa [#allocation3], 0
    // Predicated region
    $region2: #{tpu_custom_call.1} parent=1 // pred_check
      _
    $region3: #{tpu_custom_call.1} parent=1 // pred_check_branch
      %11 = sbr.rel (0) target = $region5
    $region4: #{tpu_custom_call.1} parent=1 // pred_region
      _
    $region5: #{tpu_custom_call.1} parent=1 // pred_fallthru
      _
    // Predicated region
    $region6: #{tpu_custom_call.1} parent=1 // pred_check
      _
    $region7: #{tpu_custom_call.1} parent=1 // pred_check_branch
      %13 = sbr.rel (0) target = $region9
    $region8: #{tpu_custom_call.1} parent=1 // pred_region
      _
    $region9: #{tpu_custom_call.1} parent=1 // pred_fallthru
      _
    %v14 = vld [vmem:[%s0] sm:$0xff]
    %vm15 = vcmask 261120
    %v16 = vsel %vm15, %v14, -inf
    %17 = vmax.xlane.f32.xlu0 %v16
    %v18 = vpop.xlane.xlu0 %17
    %v19 = vsub.f32 %v14, %v18
    %v20 = vmul.f32 %v19, 1.442695
    %v21 = vpow.pop %v20
    %v22 = vsel %vm15, %v21, 0.0
    %23 = vadd.xlane.f32.xlu0 %v22
    %v24 = vpop.xlane.xlu0 %23
    %v25 = vlog2.pop %v24
    %v26 = vmul.f32 %v25, 0.6931472
    %v27 = vlaneseq
    %v28 = vand.u32 %v27, 127
    %v29 = vld [vmem:[%s1] sm:$0xff]
    %vm30 = vcmp.ge.s32.totalorder %v28, 22
    %v31 = vsel %vm30, 0.01, 0.0
    %32 = vset.pattern.permute.xlu0 0
    %33 = vperm.xlu0 %32, %v29
    %v34 = vpop.permute.xlu0 %33
    %vm35 = vcmp.eq.s32.totalorder %v28, %v34
    %v36 = vsel %vm35, 0.9, %v31
    %vm37 = vcmp.ge.s32.totalorder %v29, 22
    %v38 = vsel %vm37, 0.01, 0.0
    %v39 = vsub.f32 1.0, %v38
    %v40 = vmul.f32 %v36, %v14
    %v41 = vsel %vm15, %v40, 0.0
    %42 = vadd.xlane.f32.xlu0 %v41
    %v43 = vpop.xlane.xlu0 %42
    %v44 = vadd.f32 %v18, %v26
    %v45 = vmul.f32 %v44, %v39
    %v46 = vsub.f32 %v45, %v43
    %vm47 = vcmask 7168
    %48 = vst.msk [vmem:[%s2] sm:$0xff] %vm47, %v46
    %49 = vst.msk [vmem:[#allocation2] sm:$0xff] %vm15, %v36
    // Predicated region
    $region10: #{tpu_custom_call.1} parent=1 // pred_check
      _
    $region11: #{tpu_custom_call.1} parent=1 // pred_check_branch
      %51 = sbr.rel (0) target = $region13
    $region12: #{tpu_custom_call.1} parent=1 // pred_region
      _
    $region13: #{tpu_custom_call.1} parent=1 // pred_fallthru
      _
    // Predicated region
    $region14: #{tpu_custom_call.1} parent=1 // pred_check
      _
    $region15: #{tpu_custom_call.1} parent=1 // pred_check_branch
      %53 = sbr.rel (0) target = $region17
    $region16: #{tpu_custom_call.1} parent=1 // pred_region
      %s55 = ssub.s32 128, 128
      %56 = vsyncadd [#allocation3], %s55
      %s58 = sshll.u32 [#allocation2], 4
      %s59 = int_to_ptr.vmem [resolvable:$true] %s58
      %61 = dma.vmem_to_hbm [thread:$0]  %s59, 128, %s3, [#allocation3]
    $region17: #{tpu_custom_call.1} parent=1 // pred_fallthru
      _
    // Predicated region
    $region18: #{tpu_custom_call.1} parent=1 // pred_check
      _
    $region19: #{tpu_custom_call.1} parent=1 // pred_check_branch
      %63 = sbr.rel (0) target = $region21
    $region20: #{tpu_custom_call.1} parent=1 // pred_region
      _
    $region21: #{tpu_custom_call.1} parent=1 // pred_fallthru
      _
    // Predicated region
    $region22: #{tpu_custom_call.1} parent=1 // pred_check
      _
    $region23: #{tpu_custom_call.1} parent=1 // pred_check_branch
      %65 = sbr.rel (0) target = $region25
    $region24: #{tpu_custom_call.1} parent=1 // pred_region
      %66 = dma.done [#allocation3], 128
    $region25: #{tpu_custom_call.1} parent=1 // pred_fallthru
      _
    %67 = vsyncpa [#allocation3], 1

</llo_original>
